<compile_context>
chip_gen: v7x
topology: tpu7x:2x2x1
jax: 0.10.0
libtpu: 0.0.40
codegen_flags: <defaults>
</compile_context>

<pallas_src>
import functools

import jax
import jax.numpy as jnp
from jax import lax
from jax.experimental import pallas as pl
from jax.experimental.pallas import tpu as pltpu


def _round_up(x, m):
    return ((x + m - 1) // m) * m


def _pick_tile_b(b, c):
    """Batch-tile size: multiple of 8, ~1 MiB of f32 logits per tile.

    Keeps (2x double-buffered input tile + a few (TB, C) f32 intermediates)
    comfortably under the default scoped-VMEM limit on v5e/v6e/v7x.
    """
    budget_elems = (1 << 20) // 4           # 1 MiB of f32
    tb = max(8, (budget_elems // max(c, 1)) // 8 * 8)
    tb = min(tb, _round_up(b, 8))
    return max(tb, 8)


def _ls_nll_fused_kernel(logits_ref, targets_ref, out_ref, acc_ref,
                         *, alphas, weights, total_b):
    """One (TB, C) batch tile of one head -> accumulate weighted NLL row-sum."""
    h = pl.program_id(0)                 # head index
    i = pl.program_id(1)                 # batch-tile index
    n_h = pl.num_programs(0)
    n_i = pl.num_programs(1)

    @pl.when((h == 0) & (i == 0))
    def _init():
        acc_ref[...] = jnp.zeros_like(acc_ref)

    x = logits_ref[...].astype(jnp.float32)                      # (TB, C)
    tb, c = x.shape

    # Row-wise numerically stable log-softmax pieces (no (TB,C) logp tensor).
    m = jnp.max(x, axis=1, keepdims=True)                        # (TB, 1)
    z = x - m                                                    # (TB, C)
    lse = jnp.log(jnp.sum(jnp.exp(z), axis=1, keepdims=True))    # (TB, 1)

    labels = targets_ref[...]                                    # (TB, 1) int32
    col = lax.broadcasted_iota(jnp.int32, (tb, c), 1)
    z_at_t = jnp.sum(jnp.where(col == labels, z, 0.0),
                     axis=1, keepdims=True)                      # (TB, 1)
    sum_z = jnp.sum(z, axis=1, keepdims=True)                    # (TB, 1)

    # Per-head smoothing factor / loss weight: static floats selected by the
    # (grid-index) head id -- pure scalar work, no extra inputs or DMAs.
    alpha = jnp.float32(alphas[0])
    weight = jnp.float32(weights[0])
    for hh in range(1, len(alphas)):
        alpha = jnp.where(h == hh, jnp.float32(alphas[hh]), alpha)
        weight = jnp.where(h == hh, jnp.float32(weights[hh]), weight)

    # loss_row = -( alpha * logp[target] + (1-alpha)/C * sum_C(logp) )
    logp_at_t = z_at_t - lse                                     # (TB, 1)
    sum_logp = sum_z - float(c) * lse                            # (TB, 1)
    per_row = -(alpha * logp_at_t
                + (1.0 - alpha) * (1.0 / float(c)) * sum_logp)   # (TB, 1)

    # Mask rows past the true batch size (partial last tile).
    row = lax.broadcasted_iota(jnp.int32, (tb, 1), 0) + i * tb
    per_row = jnp.where(row < total_b, per_row, 0.0)

    acc_ref[...] += weight * jnp.sum(per_row, axis=0, keepdims=True)

    @pl.when((h == n_h - 1) & (i == n_i - 1))
    def _finalize():
        out_ref[...] = acc_ref[...] * (1.0 / float(total_b))


def ls_smoothed_nll_fused(outputs, targets, alphas, weights):
    """sum_h weights[h] * smoothed_NLL(outputs[h], targets, alphas[h]).

    One pallas_call over a (heads, batch_tiles) grid with a scratch accumulator.
    `alphas` / `weights` are static Python floats (one per head).
    """
    logits = jnp.stack([jnp.asarray(o) for o in outputs], axis=0)  # (N, B, C)
    n, b, c = logits.shape
    tb = _pick_tile_b(b, c)
    n_tiles = pl.cdiv(b, tb)

    kernel = functools.partial(
        _ls_nll_fused_kernel,
        alphas=tuple(float(a) for a in alphas),
        weights=tuple(float(w) for w in weights),
        total_b=b,
    )

    out = pl.pallas_call(
        kernel,
        out_shape=jax.ShapeDtypeStruct((1, 1), jnp.float32),
        grid=(n, n_tiles),
        in_specs=[
            # logits: head dim squeezed, (TB, C) tile per grid step.
            pl.BlockSpec((None, tb, c), lambda h, i: (h, i, 0)),
            # targets: (TB, 1) int32 column, shared across heads.
            pl.BlockSpec((tb, 1), lambda h, i: (i, 0)),
        ],
        # Output block index constant across the whole grid -> stays resident,
        # single HBM writeback at the end (accumulator pattern).
        out_specs=pl.BlockSpec((1, 1), lambda h, i: (0, 0)),
        scratch_shapes=[pltpu.VMEM((1, 1), jnp.float32)],
        compiler_params=pltpu.CompilerParams(
            # Both axes feed the shared scalar accumulator -> "arbitrary".
            dimension_semantics=("arbitrary", "arbitrary")),
    )(logits, targets.reshape(b, 1).astype(jnp.int32))
    return out[0, 0]


def nll_loss(outputs, targets, alpha):
    """Pallas equivalent of the PyTorch NLLLoss module (scalar `alpha`)."""
    return ls_smoothed_nll_fused([outputs], targets, [alpha], [1.0])


def ls_loss_forward(outputs, targets, targets_gt, indexs, alpha=0.1, lam=1.0):
    """JAX/Pallas equivalent of LSLoss.forward (all heads fused in one call)."""
    del targets_gt  # unused by the original forward as well
    del indexs      # TODO(synk): only consumed by the injected `criterion`,
                    # which is not defined in the source file; a plain
                    # cross-entropy (alpha = 1.0 head) stands in for it.
    n = len(outputs)
    alphas = [1.0] + [alpha] * (n - 1)       # head 0: pure CE; others: smoothed
    weights = [1.0] + [lam] * (n - 1)
    return ls_smoothed_nll_fused(outputs, targets, alphas, weights)


# ---------------- pure-JAX reference (for correctness check) ----------------
def _ref_nll(logits, targets, alpha):
    _, c = logits.shape
    logp = jax.nn.log_softmax(logits.astype(jnp.float32), axis=1)
    one_hot = jax.nn.one_hot(targets, c, dtype=jnp.float32)
    smooth = alpha * one_hot + (1.0 - alpha) / c
    return -jnp.mean(jnp.sum(logp * smooth, axis=1))


def _ref_ls_loss(outputs, targets, alpha=0.1, lam=1.0):
    loss = _ref_nll(outputs[0], targets, 1.0)
    for i in range(1, len(outputs)):
        loss = loss + lam * _ref_nll(outputs[i], targets, alpha)
    return loss


if __name__ == "__main__":
    key = jax.random.PRNGKey(0)
    B, C, N_OUT = 8, 32, 3   # batch, num classes, len(outputs) (main + 2 middle)

    k0, k1, k2, k3, k4 = jax.random.split(key, 5)
    outputs = [
        jax.random.normal(k0, (B, C), dtype=jnp.float32),
        jax.random.normal(k1, (B, C), dtype=jnp.float32),
        jax.random.normal(k2, (B, C), dtype=jnp.float32),
    ]
    targets = jax.random.randint(k3, (B,), 0, C, dtype=jnp.int32)
    targets_gt = jax.random.randint(k4, (B,), 0, C, dtype=jnp.int32)  # unused
    indexs = jnp.arange(B, dtype=jnp.int32)

    # Fused LSLoss forward (all 3 heads in one pallas_call).
    loss = ls_loss_forward(outputs, targets, targets_gt, indexs,
                           alpha=0.1, lam=1.0)
    loss = jax.block_until_ready(loss)
    ref = _ref_ls_loss(outputs, targets, alpha=0.1, lam=1.0)
    assert jnp.allclose(loss, ref, rtol=1e-5, atol=1e-5), (loss, ref)

    # Single-head NLLLoss module equivalent.
    single = jax.block_until_ready(nll_loss(outputs[1], targets, 0.1))
    single_ref = _ref_nll(outputs[1], targets, 0.1)
    assert jnp.allclose(single, single_ref, rtol=1e-5, atol=1e-5), (single, single_ref)

    print("KERNEL_OK")
</pallas_src>

<mosaic_0001>
module attributes {stable_mosaic.version = 11 : i64} {
  func.func @_ls_nll_fused_kernel(%arg0: i32, %arg1: i32, %arg2: memref<1x8x32xf32, #tpu.memory_space<vmem>>, %arg3: memref<8x1xi32, #tpu.memory_space<vmem>>, %arg4: memref<1x1xf32, #tpu.memory_space<vmem>>, %arg5: memref<1x1xf32, #tpu.memory_space<vmem>>) attributes {dimension_semantics = [#tpu.dimension_semantics<arbitrary>, #tpu.dimension_semantics<arbitrary>], iteration_bounds = array<i64: 3, 1>, scalar_prefetch = 0 : i64, scratch_operands = 1 : i64, tpu.core_type = #tpu.core_type<tc>, window_params = [{transform_indices = @transform_0, window_bounds = array<i64: 1, 8, 32>}, {transform_indices = @transform_1, window_bounds = array<i64: 8, 1>}, {pipeline_mode = #tpu.pipeline_mode<synchronous>, transform_indices = @transform_2, window_bounds = array<i64: 1, 1>}]} {
    %c0_i32 = arith.constant 0 : i32
    %0 = arith.cmpi eq, %arg0, %c0_i32 : i32
    %c0_i32_0 = arith.constant 0 : i32
    %1 = arith.cmpi eq, %arg1, %c0_i32_0 : i32
    %2 = arith.andi %0, %1 : i1
    %3 = arith.extui %2 : i1 to i32
    %c0_i32_1 = arith.constant 0 : i32
    %4 = arith.cmpi ne, %3, %c0_i32_1 : i32
    scf.if %4 {
      %cst_32 = arith.constant 0.000000e+00 : f32
      %66 = vector.broadcast %cst_32 : f32 to vector<1x1xf32>
      %c0_33 = arith.constant 0 : index
      %c0_34 = arith.constant 0 : index
      %67 = vector.load %arg5[%c0_33, %c0_34] : memref<1x1xf32, #tpu.memory_space<vmem>>, vector<1x1xf32>
      tpu.vector_store %arg5[%c0_33, %c0_34], %66 {strides = array<i32>} : memref<1x1xf32, #tpu.memory_space<vmem>>, vector<1x1xf32>,
    } else {
    }
    %c0 = arith.constant 0 : index
    %c0_2 = arith.constant 0 : index
    %c0_3 = arith.constant 0 : index
    %5 = vector.load %arg2[%c0, %c0_2, %c0_3] : memref<1x8x32xf32, #tpu.memory_space<vmem>>, vector<1x8x32xf32>
    %6 = vector.shape_cast %5 : vector<1x8x32xf32> to vector<8x32xf32>
    %cst = arith.constant dense<0xFF800000> : vector<8xf32>
    %7 = vector.multi_reduction <maximumf>, %6, %cst [1] : vector<8x32xf32> to vector<8xf32>
    %8 = vector.shape_cast %7 : vector<8xf32> to vector<8x1xf32>
    %9 = vector.broadcast %8 : vector<8x1xf32> to vector<8x32xf32>
    %10 = arith.subf %6, %9 : vector<8x32xf32>
    %11 = math.exp %10 : vector<8x32xf32>
    %cst_4 = arith.constant dense<0.000000e+00> : vector<8xf32>
    %12 = vector.multi_reduction <add>, %11, %cst_4 [1] : vector<8x32xf32> to vector<8xf32>
    %13 = vector.shape_cast %12 : vector<8xf32> to vector<8x1xf32>
    %14 = math.log %13 : vector<8x1xf32>
    %c0_5 = arith.constant 0 : index
    %c0_6 = arith.constant 0 : index
    %15 = vector.load %arg3[%c0_5, %c0_6] : memref<8x1xi32, #tpu.memory_space<vmem>>, vector<8x1xi32>
    %16 = tpu.iota {dimensions = array<i32: 1>} : vector<8x32xi32>
    %17 = vector.broadcast %15 : vector<8x1xi32> to vector<8x32xi32>
    %18 = arith.cmpi eq, %16, %17 : vector<8x32xi32>
    %cst_7 = arith.constant 0.000000e+00 : f32
    %19 = vector.broadcast %cst_7 : f32 to vector<8x32xf32>
    %20 = arith.select %18, %10, %19 : vector<8x32xi1>, vector<8x32xf32>
    %cst_8 = arith.constant dense<0.000000e+00> : vector<8xf32>
    %21 = vector.multi_reduction <add>, %20, %cst_8 [1] : vector<8x32xf32> to vector<8xf32>
    %22 = vector.shape_cast %21 : vector<8xf32> to vector<8x1xf32>
    %cst_9 = arith.constant dense<0.000000e+00> : vector<8xf32>
    %23 = vector.multi_reduction <add>, %10, %cst_9 [1] : vector<8x32xf32> to vector<8xf32>
    %24 = vector.shape_cast %23 : vector<8xf32> to vector<8x1xf32>
    %c1_i32 = arith.constant 1 : i32
    %25 = arith.cmpi eq, %arg0, %c1_i32 : i32
    %cst_10 = arith.constant 1.000000e-01 : f32
    %cst_11 = arith.constant 1.000000e+00 : f32
    %26 = arith.select %25, %cst_10, %cst_11 : f32
    %c1_i32_12 = arith.constant 1 : i32
    %27 = arith.cmpi eq, %arg0, %c1_i32_12 : i32
    %cst_13 = arith.constant 1.000000e+00 : f32
    %cst_14 = arith.constant 1.000000e+00 : f32
    %28 = arith.select %27, %cst_13, %cst_14 : f32
    %c2_i32 = arith.constant 2 : i32
    %29 = arith.cmpi eq, %arg0, %c2_i32 : i32
    %cst_15 = arith.constant 1.000000e-01 : f32
    %30 = arith.select %29, %cst_15, %26 : f32
    %c2_i32_16 = arith.constant 2 : i32
    %31 = arith.cmpi eq, %arg0, %c2_i32_16 : i32
    %cst_17 = arith.constant 1.000000e+00 : f32
    %32 = arith.select %31, %cst_17, %28 : f32
    %33 = arith.subf %22, %14 : vector<8x1xf32>
    %cst_18 = arith.constant 3.200000e+01 : f32
    %34 = vector.broadcast %cst_18 : f32 to vector<8x1xf32>
    %35 = arith.mulf %34, %14 : vector<8x1xf32>
    %36 = arith.subf %24, %35 : vector<8x1xf32>
    %37 = vector.broadcast %30 : f32 to vector<8x1xf32>
    %38 = arith.mulf %37, %33 : vector<8x1xf32>
    %cst_19 = arith.constant 1.000000e+00 : f32
    %39 = arith.subf %cst_19, %30 : f32
    %cst_20 = arith.constant 3.125000e-02 : f32
    %40 = arith.mulf %39, %cst_20 : f32
    %41 = vector.broadcast %40 : f32 to vector<8x1xf32>
    %42 = arith.mulf %41, %36 : vector<8x1xf32>
    %43 = arith.addf %38, %42 : vector<8x1xf32>
    %cst_21 = arith.constant 0.000000e+00 : f32
    %44 = vector.broadcast %cst_21 : f32 to vector<8x1xf32>
    %45 = arith.subf %44, %43 : vector<8x1xf32>
    %46 = tpu.iota {dimensions = array<i32: 0>} : vector<8x1xi32>
    %c8_i32 = arith.constant 8 : i32
    %47 = arith.muli %arg1, %c8_i32 : i32
    %48 = vector.broadcast %47 : i32 to vector<8x1xi32>
    %49 = arith.addi %46, %48 : vector<8x1xi32>
    %c8_i32_22 = arith.constant 8 : i32
    %50 = vector.broadcast %c8_i32_22 : i32 to vector<8x1xi32>
    %51 = arith.cmpi slt, %49, %50 : vector<8x1xi32>
    %cst_23 = arith.constant 0.000000e+00 : f32
    %52 = vector.broadcast %cst_23 : f32 to vector<8x1xf32>
    %53 = arith.select %51, %45, %52 : vector<8x1xi1>, vector<8x1xf32>
    %c0_24 = arith.constant 0 : index
    %c0_25 = arith.constant 0 : index
    %54 = vector.load %arg5[%c0_24, %c0_25] : memref<1x1xf32, #tpu.memory_space<vmem>>, vector<1x1xf32>
    %cst_26 = arith.constant dense<0.000000e+00> : vector<1xf32>
    %55 = vector.multi_reduction <add>, %53, %cst_26 [0] : vector<8x1xf32> to vector<1xf32>
    %56 = vector.shape_cast %55 : vector<1xf32> to vector<1x1xf32>
    %57 = vector.broadcast %32 : f32 to vector<1x1xf32>
    %58 = arith.mulf %57, %56 : vector<1x1xf32>
    %59 = arith.addf %54, %58 : vector<1x1xf32>
    %c0_27 = arith.constant 0 : index
    %c0_28 = arith.constant 0 : index
    %60 = vector.load %arg5[%c0_27, %c0_28] : memref<1x1xf32, #tpu.memory_space<vmem>>, vector<1x1xf32>
    tpu.vector_store %arg5[%c0_27, %c0_28], %59 {strides = array<i32>} : memref<1x1xf32, #tpu.memory_space<vmem>>, vector<1x1xf32>,
    %c2_i32_29 = arith.constant 2 : i32
    %61 = arith.cmpi eq, %arg0, %c2_i32_29 : i32
    %c0_i32_30 = arith.constant 0 : i32
    %62 = arith.cmpi eq, %arg1, %c0_i32_30 : i32
    %63 = arith.andi %61, %62 : i1
    %64 = arith.extui %63 : i1 to i32
    %c0_i32_31 = arith.constant 0 : i32
    %65 = arith.cmpi ne, %64, %c0_i32_31 : i32
    scf.if %65 {
      %c0_32 = arith.constant 0 : index
      %c0_33 = arith.constant 0 : index
      %66 = vector.load %arg5[%c0_32, %c0_33] : memref<1x1xf32, #tpu.memory_space<vmem>>, vector<1x1xf32>
      %cst_34 = arith.constant 1.250000e-01 : f32
      %67 = vector.broadcast %cst_34 : f32 to vector<1x1xf32>
      %68 = arith.mulf %66, %67 : vector<1x1xf32>
      %c0_35 = arith.constant 0 : index
      %c0_36 = arith.constant 0 : index
      %69 = vector.load %arg4[%c0_35, %c0_36] : memref<1x1xf32, #tpu.memory_space<vmem>>, vector<1x1xf32>
      tpu.vector_store %arg4[%c0_35, %c0_36], %68 {strides = array<i32>} : memref<1x1xf32, #tpu.memory_space<vmem>>, vector<1x1xf32>,
    } else {
    }
    return
  }
  func.func @transform_0(%arg0: i32, %arg1: i32) -> (i32, i32, i32) {
    %c0_i32 = arith.constant 0 : i32
    %c0_i32_0 = arith.constant 0 : i32
    return %arg0, %arg1, %c0_i32 : i32, i32, i32
  }
  func.func @transform_1(%arg0: i32, %arg1: i32) -> (i32, i32) {
    %c0_i32 = arith.constant 0 : i32
    %c0_i32_0 = arith.constant 0 : i32
    return %arg1, %c0_i32 : i32, i32
  }
  func.func @transform_2(%arg0: i32, %arg1: i32) -> (i32, i32) {
    %c0_i32 = arith.constant 0 : i32
    %c0_i32_0 = arith.constant 0 : i32
    %c0_i32_1 = arith.constant 0 : i32
    return %c0_i32, %c0_i32_0 : i32, i32
  }
}

</mosaic_0001>

<llo_original>
// kernel: tpu_custom_call.1
$region0: #{tpu_custom_call.1}
  #allocation0 [shape = 'u32[]', space=smem, size = 0x4, offset = 0x4, fixed_abs, tag = 'smem constant byte address 0x4 - core index']
  #allocation1 [shape = 'u32[144,128]{1,0:T(1,128)}', space=vmem, size = 0x12000, scoped, tag = 'internal scratch']
  #allocation2 [shape = 'f32[1,1]{1,0:T(1,128)}', space=vmem, size = 0x200, scoped, tag = 'scratch operand']
  %s0 = inlined_call_operand.hbm [shape: f32[3,8,32], index: 0, kind: input, shape index: {}]
  %s1 = inlined_call_operand.vmem [shape: s32[8,1], index: 1, kind: input, shape index: {}]
  %s2 = inlined_call_operand.hbm [shape: f32[1,1], index: 2, kind: output, shape index: {}]
  %s3 = sld [smem:[#allocation0]]
  $region53: #{tpu_custom_call.1} parent=0
    _
  %s5 = ssub.s32 1, %s3
  %s6 = scalar_select 0, %s5, %s3
  $region1: #{tpu_custom_call.1} parent=0
    #allocation3 [shape = 'u8[8192]{0}', space=vmem, size = 0x2000, scoped, tag = 'input window, operand 0']
    #allocation4 [shape = 's32[2]{0}', space=sflag, size = 0x8, scoped, tag = 'scoped memory for tpu_custom_call.1']
    #allocation5 [shape = 's32[2]{0}', space=sflag, size = 0x8, scoped, tag = 'scoped memory for tpu_custom_call.1']
    #allocation6 [shape = 'u8[512]{0}', space=vmem, size = 0x400, scoped, tag = 'output window, operand 0, single buffered']
    %7 = vsyncpa [#allocation4], 0
    %s8 = scalar_lea.sflag [#allocation4], 1
    %9 = vsyncpa %s8, 0
    %10 = vsyncpa [#allocation5], 0
    loop: start=0, step=1, limit=5
    $region2: #{tpu_custom_call.1} parent=1 // loop_pre_header
      _
    $region3: #{tpu_custom_call.1} parent=1 // loop_header
      %s12 = sphi 0, %s16
      %p13 = scmp.ge.s32.totalorder %s12, 5
      %s19 = sphi 0, %s31
      %s20 = sphi 0, %s27
      %s21 = sphi 0, %s19
      %s22 = sphi 0, %s20
      %s23 = sphi 0, %s21
      %s24 = sphi 0, %s22
      %s36 = sphi 0, %s38
      %s39 = sphi 0, %s36
      %s40 = sphi 0, %s39
      %s56 = sphi 0, %s40
      %s62 = sphi 0, %s64
      %s65 = sphi 0, %s62
      %s66 = sphi 0, %s65
      %s82 = sphi 0, %s66
      %s86 = sphi 0, %s86
      %s88 = sphi 0, %s86
      %s89 = sphi 0, %s88
      %s103 = sphi 0, %s89
    $region4: #{tpu_custom_call.1} parent=1 // loop_header_branch
      %15 = sbr.rel (%p13) target = $region8
    $region5: #{tpu_custom_call.1} parent=1 // loop_body
      %s17 = ssub.s32 %s12, 1
      %s18 = ssub.s32 %s12, 2
      %s25 = sadd.s32 1, %s20
      %p26 = scmp.ge.s32.totalorder %s25, 1
      %s27 = scalar_select %p26, 0, %s25
      %s28 = sadd.s32 1, %s19
      %s29 = scalar_select %p26, %s28, %s19
      %p30 = scmp.ge.s32.totalorder %s29, 3
      %s31 = scalar_select %p30, 0, %s29
      %s32 = ssub.s32 %s19, %s31
      %s33 = ssub.s32 %s20, %s27
      %s34 = sor.u32 %s32, %s33
      %p35 = scmp.eq.s32.totalorder %s34, 0
      %s37 = sadd.s32 %s36, 1
      %s38 = scalar_select %p35, %s36, %s37
      %p41 = pneg %p35
      %p42 = scmp.eq.s32.totalorder %s12, 2
      %p43 = por %p41, %p42
      %p44 = scmp.ne.s32.totalorder %s36, %s39
      %p45 = scmp.eq.s32.totalorder %s12, 0
      %p46 = por %p44, %p45
      %p47 = scmp.ne.s32.totalorder %s36, %s39
      %p48 = scmp.eq.s32.totalorder %s17, 2
      %p49 = por %p47, %p48
      %p50 = scmp.ne.s32.totalorder %s39, %s40
      %p51 = scmp.eq.s32.totalorder %s17, 0
      %p52 = por %p50, %p51
      %p53 = scmp.ne.s32.totalorder %s39, %s40
      %p54 = scmp.eq.s32.totalorder %s18, 2
      %p55 = por %p53, %p54
      %p57 = scmp.ne.s32.totalorder %s40, %s56
      %p58 = scmp.eq.s32.totalorder %s18, 0
      %p59 = por %p57, %p58
      %s60 = ssub.s32 %s20, %s27
      %p61 = scmp.eq.s32.totalorder %s60, 0
      %s63 = sadd.s32 %s62, 1
      %s64 = scalar_select %p61, %s62, %s63
      %p67 = pneg %p61
      %p68 = scmp.eq.s32.totalorder %s12, 2
      %p69 = por %p67, %p68
      %p70 = scmp.ne.s32.totalorder %s62, %s65
      %p71 = scmp.eq.s32.totalorder %s12, 0
      %p72 = por %p70, %p71
      %p73 = scmp.ne.s32.totalorder %s62, %s65
      %p74 = scmp.eq.s32.totalorder %s17, 2
      %p75 = por %p73, %p74
      %p76 = scmp.ne.s32.totalorder %s65, %s66
      %p77 = scmp.eq.s32.totalorder %s17, 0
      %p78 = por %p76, %p77
      %p79 = scmp.ne.s32.totalorder %s65, %s66
      %p80 = scmp.eq.s32.totalorder %s18, 2
      %p81 = por %p79, %p80
      %p83 = scmp.ne.s32.totalorder %s66, %s82
      %p84 = scmp.eq.s32.totalorder %s18, 0
      %p85 = por %p83, %p84
      %s87 = sadd.s32 %s86, 1
      %p90 = scmp.eq.s32.totalorder %s12, 2
      %p91 = scmp.ne.s32.totalorder %s86, %s88
      %p92 = scmp.eq.s32.totalorder %s12, 0
      %p93 = por %p91, %p92
      %p94 = scmp.ne.s32.totalorder %s86, %s88
      %p95 = scmp.eq.s32.totalorder %s17, 2
      %p96 = por %p94, %p95
      %p97 = scmp.ne.s32.totalorder %s88, %s89
      %p98 = scmp.eq.s32.totalorder %s17, 0
      %p99 = por %p97, %p98
      %p100 = scmp.ne.s32.totalorder %s88, %s89
      %p101 = scmp.eq.s32.totalorder %s18, 2
      %p102 = por %p100, %p101
      %p104 = scmp.ne.s32.totalorder %s89, %s103
      %p105 = scmp.eq.s32.totalorder %s18, 0
      %p106 = por %p104, %p105
      %p107 = scmp.le.s32.totalorder 1, %s12
      %p108 = scmp.lt.s32.totalorder %s12, 4
      %p109 = pnand %p107, %p108
      %p110 = pneg %p109
      // Predicated region
      $region9: #{tpu_custom_call.1} parent=5 // pred_check
        _
      $region10: #{tpu_custom_call.1} parent=5 // pred_check_branch
        %112 = sbr.rel (%p109) target = $region12
      $region11: #{tpu_custom_call.1} parent=5 // pred_region
        %s113 = ssub.s32 %s12, 1
        // Predicated region
        $region13: #{tpu_custom_call.1} parent=11 // pred_check
          %p114 = pneg %p78
        $region14: #{tpu_custom_call.1} parent=11 // pred_check_branch
          %116 = sbr.rel (%p114) target = $region16
        $region15: #{tpu_custom_call.1} parent=11 // pred_region
          %p117 = scmp.lt.s32.totalorder %s22, 0
          %s118 = scalar_select %p117, %s22, 0
          %s119 = smul.addr %s118, 8
          %s120 = scalar_lea.vmem %s1, %s119
        $region16: #{tpu_custom_call.1} parent=11 // pred_fallthru
          _
      $region12: #{tpu_custom_call.1} parent=5 // pred_fallthru
        _
      %p121 = scmp.lt.s32.totalorder %s12, 3
      // Predicated region
      $region17: #{tpu_custom_call.1} parent=5 // pred_check
        %p122 = pneg %p121
      $region18: #{tpu_custom_call.1} parent=5 // pred_check_branch
        %124 = sbr.rel (%p122) target = $region20
      $region19: #{tpu_custom_call.1} parent=5 // pred_region
        // Predicated region
        $region21: #{tpu_custom_call.1} parent=19 // pred_check
          %p125 = pneg %p46
        $region22: #{tpu_custom_call.1} parent=19 // pred_check_branch
          %127 = sbr.rel (%p125) target = $region24
        $region23: #{tpu_custom_call.1} parent=19 // pred_region
          %s128 = sand.u32 %s36, 1
          %s129 = scalar_lea.sflag [#allocation4], %s128
          %s130 = sand.u32 %s36, 1
          %s131 = smul.addr %s130, 8
          %s132 = scalar_lea.vmem [#allocation3], %s131
          %s134 = ssub.s32 128, 128
          %135 = vsyncadd %s129, %s134
          %s136 = sadd.s32 %s20, %s19
          %s137 = smul.addr %s136, 128
          %s138 = scalar_lea.hbm %s0, %s137
          %s140 = sshll.u32 %s132, 4
          %s141 = int_to_ptr.vmem [resolvable:$true] %s140
          %143 = dma.hbm_to_vmem [thread:$0]  %s138, 128, %s141, %s129
        $region24: #{tpu_custom_call.1} parent=19 // pred_fallthru
          _
      $region20: #{tpu_custom_call.1} parent=5 // pred_fallthru
        _
      %p144 = scmp.le.s32.totalorder 1, %s12
      %p145 = scmp.lt.s32.totalorder %s12, 4
      %p146 = pnand %p144, %p145
      %p147 = pneg %p146
      // Predicated region
      $region25: #{tpu_custom_call.1} parent=5 // pred_check
        _
      $region26: #{tpu_custom_call.1} parent=5 // pred_check_branch
        %149 = sbr.rel (%p146) target = $region28
      $region27: #{tpu_custom_call.1} parent=5 // pred_region
        %s150 = ssub.s32 %s12, 1
        %s151 = sand.u32 %s39, 1
        %s152 = scalar_lea.sflag [#allocation4], %s151
        %s153 = sand.u32 %s39, 1
        %s154 = smul.addr %s153, 8
        %s155 = scalar_lea.vmem [#allocation3], %s154
        // Predicated region
        $region29: #{tpu_custom_call.1} parent=27 // pred_check
          %p156 = pneg %p52
        $region30: #{tpu_custom_call.1} parent=27 // pred_check_branch
          %158 = sbr.rel (%p156) target = $region32
        $region31: #{tpu_custom_call.1} parent=27 // pred_region
          %159 = dma.done %s152, 128
        $region32: #{tpu_custom_call.1} parent=27 // pred_fallthru
          _
        %s160 = sand.u32 %s39, 1
        %s161 = scalar_lea.sflag [#allocation4], %s160
        %s162 = sand.u32 %s39, 1
        %s163 = smul.addr %s162, 8
        %s164 = scalar_lea.vmem [#allocation3], %s163
        %p165 = pneg %p52
        %p166 = pneg %p49
        %p167 = scmp.lt.s32.totalorder %s22, 0
        %s168 = scalar_select %p167, %s22, 0
        %s169 = smul.addr %s168, 8
        %s170 = scalar_lea.vmem %s1, %s169
        %p171 = pneg %p78
        %p172 = pneg %p75
        %p173 = pneg %p99
        %p174 = pneg %p96
        %p175 = scmp.lt.s32.totalorder %s22, 0
        %s176 = scalar_select %p175, %s22, 0
        %s177 = smul.addr %s176, 8
        %s178 = scalar_lea.vmem %s1, %s177
        %p179 = scmp.eq.s32.totalorder %s21, 0
        %p180 = scmp.eq.s32.totalorder %s22, 0
        %p181 = pnand %p179, %p180
        %p182 = pneg %p181
        // Predicated region
        $region33: #{tpu_custom_call.1} parent=27 // pred_check
          _
        $region34: #{tpu_custom_call.1} parent=27 // pred_check_branch
          %184 = sbr.rel (%p181) target = $region36
        $region35: #{tpu_custom_call.1} parent=27 // pred_region
          %vm185 = vcmask 0
          %186 = vst.msk [vmem:[#allocation2] sm:$0x1] %vm185, 0.0
        $region36: #{tpu_custom_call.1} parent=27 // pred_fallthru
          _
        %v187 = vld [vmem:[%s155] sm:$0xff]
        %vm188 = vcmask 261120
        %v189 = vsel %vm188, %v187, -inf
        %190 = vmax.xlane.f32.xlu0 %v189
        %v191 = vpop.xlane.xlu0 %190
        %v192 = vsub.f32 %v187, %v191
        %v193 = vmul.f32 %v192, 1.442695
        %v194 = vpow.pop %v193
        %v195 = vsel %vm188, %v194, 0.0
        %196 = vadd.xlane.f32.xlu0 %v195
        %v197 = vpop.xlane.xlu0 %196
        %v198 = vlog2.pop %v197
        %v199 = vmul.f32 %v198, 0.6931472
        %v200 = vld [vmem:[%s178] sm:$0xff]
        %v201 = vlaneseq
        %v202 = vand.u32 %v201, 127
        %203 = vset.pattern.permute.xlu0 0
        %204 = vperm.xlu0 %203, %v200
        %v205 = vpop.permute.xlu0 %204
        %vm206 = vcmp.eq.s32.totalorder %v202, %v205
        %v207 = vsel %vm206, %v192, 0.0
        %v208 = vsel %vm188, %v207, 0.0
        %209 = vadd.xlane.f32.xlu0 %v208
        %v210 = vpop.xlane.xlu0 %209
        %v211 = vsel %vm188, %v192, 0.0
        %212 = vadd.xlane.f32.xlu0 %v211
        %v213 = vpop.xlane.xlu0 %212
        %p214 = scmp.eq.s32.totalorder %s21, 1
        %s215 = scalar_select %p214, 0.1, 1.0
        %p216 = scmp.eq.s32.totalorder %s21, 2
        %s217 = scalar_select %p216, 0.1, %s215
        %v218 = vsub.f32 %v210, %v199
        %v219 = vmul.f32 %v199, 32.0
        %v220 = vsub.f32 %v213, %v219
        %v221 = vstv %s217
        %v222 = vmul.f32 %v221, %v218
        %s223 = ssub.f32 1.0, %s217
        %s224 = smul.f32 %s223, 0.03125
        %v225 = vstv %s224
        %v226 = vmul.f32 %v225, %v220
        %v227 = vadd.f32 %v222, %v226
        %v228 = vsub.f32 0.0, %v227
        %v229 = vlaneseq
        %v230 = vshrl.u32 %v229, 7
        %s231 = smul.u32 %s22, 8
        %v232 = vstv %s231
        %v233 = vadd.s32 %v230, %v232
        %vm234 = vcmp.lt.s32.totalorder %v233, 8
        %v235 = vsel %vm234, %v228, 0.0
        %v236 = vld [vmem:[#allocation2] sm:$0x1]
        %v237 = vrot.slane %v235, 4
        %v238 = vadd.f32 %v235, %v237
        %v239 = vrot.slane %v238, 2
        %v240 = vadd.f32 %v238, %v239
        %v241 = vrot.slane %v240, 1
        %v242 = vadd.f32 %v240, %v241
        %v243 = vadd.f32 %v236, %v242
        %vm244 = vcmask 0
        %245 = vst.msk [vmem:[#allocation2] sm:$0x1] %vm244, %v243
        %p246 = pnand %p216, %p180
        %p247 = pneg %p246
        // Predicated region
        $region37: #{tpu_custom_call.1} parent=27 // pred_check
          _
        $region38: #{tpu_custom_call.1} parent=27 // pred_check_branch
          %249 = sbr.rel (%p246) target = $region40
        $region39: #{tpu_custom_call.1} parent=27 // pred_region
          %v250 = vld [vmem:[#allocation2] sm:$0x1]
          %v251 = vmul.f32 %v250, 0.125
          %252 = vst.msk [vmem:[#allocation6] sm:$0x1] %vm244, %v251
        $region40: #{tpu_custom_call.1} parent=27 // pred_fallthru
          _
        // Predicated region
        $region41: #{tpu_custom_call.1} parent=27 // pred_check
          %p253 = pneg %p96
        $region42: #{tpu_custom_call.1} parent=27 // pred_check_branch
          %255 = sbr.rel (%p253) target = $region44
        $region43: #{tpu_custom_call.1} parent=27 // pred_region
          %s257 = ssub.s32 16, 16
          %258 = vsyncadd [#allocation5], %s257
          %s260 = sshll.u32 [#allocation6], 4
          %s261 = int_to_ptr.vmem [resolvable:$true] %s260
          %263 = dma.vmem_to_hbm [thread:$0]  %s261, 16, %s2, [#allocation5]
        $region44: #{tpu_custom_call.1} parent=27 // pred_fallthru
          _
        // Predicated region
        $region45: #{tpu_custom_call.1} parent=27 // pred_check
          %p264 = pneg %p96
        $region46: #{tpu_custom_call.1} parent=27 // pred_check_branch
          %266 = sbr.rel (%p264) target = $region48
        $region47: #{tpu_custom_call.1} parent=27 // pred_region
          %267 = dma.done [#allocation5], 16
        $region48: #{tpu_custom_call.1} parent=27 // pred_fallthru
          _
      $region28: #{tpu_custom_call.1} parent=5 // pred_fallthru
        _
      %p268 = scmp.le.s32.totalorder 2, %s12
      // Predicated region
      $region49: #{tpu_custom_call.1} parent=5 // pred_check
        %p269 = pneg %p268
      $region50: #{tpu_custom_call.1} parent=5 // pred_check_branch
        %271 = sbr.rel (%p269) target = $region52
      $region51: #{tpu_custom_call.1} parent=5 // pred_region
        %s272 = ssub.s32 %s12, 2
      $region52: #{tpu_custom_call.1} parent=5 // pred_fallthru
        _
    $region6: #{tpu_custom_call.1} parent=1 // loop_footer
      %s16 = sadd.s32 1, %s12
    $region7: #{tpu_custom_call.1} parent=1 // loop_footer_branch
      %11 = sbr.rel target = $region3
    $region8: #{tpu_custom_call.1} parent=1 // loop_exit
      _
    %273 = vsyncpa [#allocation4], 1
    %s274 = scalar_lea.sflag [#allocation4], 1
    %275 = vsyncpa %s274, 1
    %276 = vsyncpa [#allocation5], 1
    %s277 = scalar_lea.sflag [#allocation5], 1
    %278 = vsyncpa %s277, 1

</llo_original>
